<compile_context>
chip_gen: v5e
topology: v5e:2x2
jax: 0.10.0
libtpu: 0.0.40
codegen_flags: <defaults>
</compile_context>

<pallas_src>
import math

import jax
import jax.numpy as jnp
from jax.experimental import pallas as pl
from jax.experimental.pallas import tpu as pltpu

# ---- synthetic module hyper-parameters (small, consistent with the forward) ----
NZ0 = 32            # miner.nz0  (input latent dim, == MineGAN.nz)
MINER_H = 64        # miner hidden width
Z_DIM = 128         # miner output dim == Gmapping z_dim
W_DIM = 128         # Gmapping w_dim
N_MAP_LAYERS = 3    # mapping FC layers (StyleGAN uses 8; kept small here)
NUM_WS = 8          # dlatent broadcast count
B = 8               # batch

LR_MUL = 0.01               # StyleGAN mapping lr_multiplier
ACT_GAIN = math.sqrt(2.0)   # leaky-relu gain
SLOPE = 0.2                 # leaky-relu negative slope

PAD = 128                           # lane-dense padded feature width
N_LAYERS_TOTAL = 2 + N_MAP_LAYERS   # 2 miner linears + mapping FC stack

# Pixel-norm averages over all PAD lanes; only valid because Z_DIM fills them.
assert Z_DIM == PAD, "pixel-norm divisor assumes Z_DIM == PAD (no padded lanes)"


# --------------------------------------------------------------------------
# Fused kernel: miner MLP -> pixel-norm -> mapping FC stack -> num_ws broadcast
# --------------------------------------------------------------------------
def _minegan_kernel(z0_ref, wts_ref, bias_ref, out_ref):
    # z0_ref  : (B, NZ0)            f32
    # wts_ref : (5, 128, 128)       bf16, zero-padded, gains pre-folded
    # bias_ref: (5, 1, 128)         f32,  zero-padded, gains pre-folded
    # out_ref : (B, NUM_WS, W_DIM)  f32  (broadcast dlatents)

    # ---------------- miner: Linear -> ReLU -> Linear ----------------
    x = z0_ref[...].astype(jnp.bfloat16)
    # static, tile-aligned slice of the first packed weight (32 = 2 bf16 tiles)
    h = (jnp.dot(x, wts_ref[0, :NZ0, :], preferred_element_type=jnp.float32)
         + bias_ref[0])
    h = jnp.maximum(h, 0.0)
    z = (jnp.dot(h.astype(jnp.bfloat16), wts_ref[1],
                 preferred_element_type=jnp.float32) + bias_ref[1])

    # ---------------- Gmapping ----------------
    # pixel norm over the feature axis (StyleGAN "normalize_latents");
    # Z_DIM == 128 lanes exactly, so the mean divisor is correct.
    z = z * jax.lax.rsqrt(jnp.mean(z * z, axis=-1, keepdims=True) + 1e-8)

    # mapping FC stack. Weight gain (lr_mul/sqrt(fan_in)), bias gain (lr_mul)
    # and the sqrt(2) activation gain were folded into wts/bias at pack time,
    # so the body is just dot + bias + leaky_relu(0.2).
    x = z
    for k in range(2, 2 + N_MAP_LAYERS):
        y = (jnp.dot(x.astype(jnp.bfloat16), wts_ref[k],
                     preferred_element_type=jnp.float32) + bias_ref[k])
        x = jnp.maximum(y, SLOPE * y)   # leaky-relu, 2 VPU ops

    # dlatent broadcast to num_ws, fused into the kernel (dense (B*NUM_WS,128) slab)
    out_ref[...] = jnp.broadcast_to(x[:, None, :], out_ref.shape)


# --------------------------------------------------------------------------
# Parameter construction / packing
# --------------------------------------------------------------------------
def init_params(key):
    """Raw (unpacked, f32) parameters matching the PyTorch module's layout."""
    ks = jax.random.split(key, 2 + N_MAP_LAYERS)
    # miner (standard nn.Linear-like init, deterministic)
    mw0 = jax.random.normal(ks[0], (NZ0, MINER_H), jnp.float32) * 0.02
    mb0 = jnp.zeros((MINER_H,), jnp.float32)
    mw1 = jax.random.normal(ks[1], (MINER_H, Z_DIM), jnp.float32) * 0.02
    mb1 = jnp.zeros((Z_DIM,), jnp.float32)
    # StyleGAN mapping layers: weight ~ N(0,1)/lr_mul, bias = 0
    map_params = []
    in_dim = Z_DIM
    for i in range(N_MAP_LAYERS):
        w = jax.random.normal(ks[2 + i], (in_dim, W_DIM), jnp.float32) / LR_MUL
        b = jnp.zeros((W_DIM,), jnp.float32)
        map_params.append((w, b))
        in_dim = W_DIM
    return (mw0, mb0, mw1, mb1), tuple(map_params)


def pack_params(params):
    """Pad every layer to 128x128, fold StyleGAN runtime gains, pack to 2 arrays."""
    (mw0, mb0, mw1, mb1), map_params = params

    def pad_w(w):
        out = jnp.zeros((PAD, PAD), jnp.float32)
        return out.at[: w.shape[0], : w.shape[1]].set(w)

    def pad_b(b):
        out = jnp.zeros((PAD,), jnp.float32)
        return out.at[: b.shape[0]].set(b)

    ws = [pad_w(mw0), pad_w(mw1)]
    bs = [pad_b(mb0), pad_b(mb1)]
    for (w, b) in map_params:
        fan_in = w.shape[0]
        # fold: weight gain * leaky-relu gain (valid since ACT_GAIN > 0)
        wg = (LR_MUL / math.sqrt(fan_in)) * ACT_GAIN
        bg = LR_MUL * ACT_GAIN
        ws.append(pad_w(w * wg))
        bs.append(pad_b(b * bg))

    wts_packed = jnp.stack(ws).astype(jnp.bfloat16)              # (5, 128, 128)
    bias_packed = jnp.stack(bs)[:, None, :].astype(jnp.float32)  # (5, 1, 128)
    return wts_packed, bias_packed


# --------------------------------------------------------------------------
# Forward wrapper (gridless, whole-array VMEM-resident operands)
# --------------------------------------------------------------------------
def minegan_forward(z0, packed_params):
    wts_packed, bias_packed = packed_params
    batch = z0.shape[0]

    # ~1.1 MFLOP of matmul, ~200 KB of operands -> tiny custom call.
    cost = pl.CostEstimate(flops=1_200_000, transcendentals=8,
                           bytes_accessed=200_000)

    return pl.pallas_call(
        _minegan_kernel,
        out_shape=jax.ShapeDtypeStruct((batch, NUM_WS, W_DIM), jnp.float32),
        in_specs=[
            pl.BlockSpec(memory_space=pltpu.MemorySpace.VMEM),
            pl.BlockSpec(memory_space=pltpu.MemorySpace.VMEM),
            pl.BlockSpec(memory_space=pltpu.MemorySpace.VMEM),
        ],
        out_specs=pl.BlockSpec(memory_space=pltpu.MemorySpace.VMEM),
        cost_estimate=cost,
    )(z0, wts_packed, bias_packed)
    # TODO(synk): truncation trick / w_avg lerp is not applied (Gmapping(z, None)
    # with default args skips it), and exact miner/Gmapping depths are synthetic
    # since MineGAN.__init__ receives them as opaque submodules.


# --------------------------------------------------------------------------
# Pure-JAX reference (f32, unpacked params, original gain placement)
# --------------------------------------------------------------------------
def minegan_reference(z0, params):
    (mw0, mb0, mw1, mb1), map_params = params
    h = jnp.maximum(z0 @ mw0 + mb0, 0.0)
    z = h @ mw1 + mb1
    z = z * jax.lax.rsqrt(jnp.mean(z * z, axis=-1, keepdims=True) + 1e-8)
    x = z
    for (w, b) in map_params:
        wg = LR_MUL / math.sqrt(w.shape[0])
        y = x @ w * wg + b * LR_MUL
        x = jnp.where(y >= 0.0, y, SLOPE * y) * ACT_GAIN
    return jnp.broadcast_to(x[:, None, :], (z0.shape[0], NUM_WS, W_DIM))


if __name__ == "__main__":
    key = jax.random.PRNGKey(0)
    kp, kz = jax.random.split(key)
    params = init_params(kp)
    packed = pack_params(params)
    z0 = jax.random.normal(kz, (B, NZ0), jnp.float32)

    ws = minegan_forward(z0, packed)
    jax.block_until_ready(ws)
    assert ws.shape == (B, NUM_WS, W_DIM) and ws.dtype == jnp.float32

    # loose tolerance: kernel uses bf16 weights/activations (f32 accumulation)
    ref = minegan_reference(z0, params)
    err = float(jnp.max(jnp.abs(ws - ref)))
    assert err < 0.1, f"max abs err vs reference = {err}"

    print("KERNEL_OK")
</pallas_src>

<mosaic_0001>
module attributes {stable_mosaic.version = 11 : i64} {
  func.func @_minegan_kernel(%arg0: memref<8x32xf32, #tpu.memory_space<vmem>>, %arg1: memref<5x128x128xbf16, #tpu.memory_space<vmem>>, %arg2: memref<5x1x128xf32, #tpu.memory_space<vmem>>, %arg3: memref<8x8x128xf32, #tpu.memory_space<vmem>>) attributes {dimension_semantics = [], scalar_prefetch = 0 : i64, scratch_operands = 0 : i64, tpu.core_type = #tpu.core_type<tc>} {
    %c0 = arith.constant 0 : index
    %c0_0 = arith.constant 0 : index
    %0 = vector.load %arg0[%c0, %c0_0] : memref<8x32xf32, #tpu.memory_space<vmem>>, vector<8x32xf32>
    %1 = arith.truncf %0 : vector<8x32xf32> to vector<8x32xbf16>
    %c0_1 = arith.constant 0 : index
    %c0_2 = arith.constant 0 : index
    %c0_3 = arith.constant 0 : index
    %2 = vector.load %arg1[%c0_1, %c0_2, %c0_3] : memref<5x128x128xbf16, #tpu.memory_space<vmem>>, vector<1x32x128xbf16>
    %3 = vector.shape_cast %2 : vector<1x32x128xbf16> to vector<32x128xbf16>
    %cst = arith.constant dense<0.000000e+00> : vector<8x128xf32>
    %4 = tpu.matmul %1, %3, %cst {dimension_numbers = #tpu.dot_dimension_numbers<[1], [0], [0], [1], [0, 0, 1, 1], [], []>} : vector<8x32xbf16>, vector<32x128xbf16>, vector<8x128xf32> -> vector<8x128xf32>
    %c0_4 = arith.constant 0 : index
    %c0_5 = arith.constant 0 : index
    %c0_6 = arith.constant 0 : index
    %5 = vector.load %arg2[%c0_4, %c0_5, %c0_6] : memref<5x1x128xf32, #tpu.memory_space<vmem>>, vector<1x1x128xf32>
    %6 = vector.shape_cast %5 : vector<1x1x128xf32> to vector<1x128xf32>
    %7 = vector.broadcast %6 : vector<1x128xf32> to vector<8x128xf32>
    %8 = arith.addf %4, %7 : vector<8x128xf32>
    %cst_7 = arith.constant 0.000000e+00 : f32
    %9 = vector.broadcast %cst_7 : f32 to vector<8x128xf32>
    %10 = arith.maximumf %8, %9 : vector<8x128xf32>
    %11 = arith.truncf %10 : vector<8x128xf32> to vector<8x128xbf16>
    %c1 = arith.constant 1 : index
    %c0_8 = arith.constant 0 : index
    %c0_9 = arith.constant 0 : index
    %12 = vector.load %arg1[%c1, %c0_8, %c0_9] : memref<5x128x128xbf16, #tpu.memory_space<vmem>>, vector<1x128x128xbf16>
    %13 = vector.shape_cast %12 : vector<1x128x128xbf16> to vector<128x128xbf16>
    %cst_10 = arith.constant dense<0.000000e+00> : vector<8x128xf32>
    %14 = tpu.matmul %11, %13, %cst_10 {dimension_numbers = #tpu.dot_dimension_numbers<[1], [0], [0], [1], [0, 0, 1, 1], [], []>} : vector<8x128xbf16>, vector<128x128xbf16>, vector<8x128xf32> -> vector<8x128xf32>
    %c1_11 = arith.constant 1 : index
    %c0_12 = arith.constant 0 : index
    %c0_13 = arith.constant 0 : index
    %15 = vector.load %arg2[%c1_11, %c0_12, %c0_13] : memref<5x1x128xf32, #tpu.memory_space<vmem>>, vector<1x1x128xf32>
    %16 = vector.shape_cast %15 : vector<1x1x128xf32> to vector<1x128xf32>
    %17 = vector.broadcast %16 : vector<1x128xf32> to vector<8x128xf32>
    %18 = arith.addf %14, %17 : vector<8x128xf32>
    %19 = arith.mulf %18, %18 : vector<8x128xf32>
    %cst_14 = arith.constant dense<0.000000e+00> : vector<8xf32>
    %20 = vector.multi_reduction <add>, %19, %cst_14 [1] : vector<8x128xf32> to vector<8xf32>
    %21 = vector.shape_cast %20 : vector<8xf32> to vector<8x1xf32>
    %cst_15 = arith.constant 1.280000e+02 : f32
    %22 = vector.broadcast %cst_15 : f32 to vector<8x1xf32>
    %23 = arith.divf %21, %22 : vector<8x1xf32>
    %cst_16 = arith.constant 9.99999993E-9 : f32
    %24 = vector.broadcast %cst_16 : f32 to vector<8x1xf32>
    %25 = arith.addf %23, %24 : vector<8x1xf32>
    %26 = math.rsqrt %25 : vector<8x1xf32>
    %27 = vector.broadcast %26 : vector<8x1xf32> to vector<8x128xf32>
    %28 = arith.mulf %18, %27 : vector<8x128xf32>
    %29 = arith.truncf %28 : vector<8x128xf32> to vector<8x128xbf16>
    %c2 = arith.constant 2 : index
    %c0_17 = arith.constant 0 : index
    %c0_18 = arith.constant 0 : index
    %30 = vector.load %arg1[%c2, %c0_17, %c0_18] : memref<5x128x128xbf16, #tpu.memory_space<vmem>>, vector<1x128x128xbf16>
    %31 = vector.shape_cast %30 : vector<1x128x128xbf16> to vector<128x128xbf16>
    %cst_19 = arith.constant dense<0.000000e+00> : vector<8x128xf32>
    %32 = tpu.matmul %29, %31, %cst_19 {dimension_numbers = #tpu.dot_dimension_numbers<[1], [0], [0], [1], [0, 0, 1, 1], [], []>} : vector<8x128xbf16>, vector<128x128xbf16>, vector<8x128xf32> -> vector<8x128xf32>
    %c2_20 = arith.constant 2 : index
    %c0_21 = arith.constant 0 : index
    %c0_22 = arith.constant 0 : index
    %33 = vector.load %arg2[%c2_20, %c0_21, %c0_22] : memref<5x1x128xf32, #tpu.memory_space<vmem>>, vector<1x1x128xf32>
    %34 = vector.shape_cast %33 : vector<1x1x128xf32> to vector<1x128xf32>
    %35 = vector.broadcast %34 : vector<1x128xf32> to vector<8x128xf32>
    %36 = arith.addf %32, %35 : vector<8x128xf32>
    %cst_23 = arith.constant 2.000000e-01 : f32
    %37 = vector.broadcast %cst_23 : f32 to vector<8x128xf32>
    %38 = arith.mulf %37, %36 : vector<8x128xf32>
    %39 = arith.maximumf %36, %38 : vector<8x128xf32>
    %40 = arith.truncf %39 : vector<8x128xf32> to vector<8x128xbf16>
    %c3 = arith.constant 3 : index
    %c0_24 = arith.constant 0 : index
    %c0_25 = arith.constant 0 : index
    %41 = vector.load %arg1[%c3, %c0_24, %c0_25] : memref<5x128x128xbf16, #tpu.memory_space<vmem>>, vector<1x128x128xbf16>
    %42 = vector.shape_cast %41 : vector<1x128x128xbf16> to vector<128x128xbf16>
    %cst_26 = arith.constant dense<0.000000e+00> : vector<8x128xf32>
    %43 = tpu.matmul %40, %42, %cst_26 {dimension_numbers = #tpu.dot_dimension_numbers<[1], [0], [0], [1], [0, 0, 1, 1], [], []>} : vector<8x128xbf16>, vector<128x128xbf16>, vector<8x128xf32> -> vector<8x128xf32>
    %c3_27 = arith.constant 3 : index
    %c0_28 = arith.constant 0 : index
    %c0_29 = arith.constant 0 : index
    %44 = vector.load %arg2[%c3_27, %c0_28, %c0_29] : memref<5x1x128xf32, #tpu.memory_space<vmem>>, vector<1x1x128xf32>
    %45 = vector.shape_cast %44 : vector<1x1x128xf32> to vector<1x128xf32>
    %46 = vector.broadcast %45 : vector<1x128xf32> to vector<8x128xf32>
    %47 = arith.addf %43, %46 : vector<8x128xf32>
    %cst_30 = arith.constant 2.000000e-01 : f32
    %48 = vector.broadcast %cst_30 : f32 to vector<8x128xf32>
    %49 = arith.mulf %48, %47 : vector<8x128xf32>
    %50 = arith.maximumf %47, %49 : vector<8x128xf32>
    %51 = arith.truncf %50 : vector<8x128xf32> to vector<8x128xbf16>
    %c4 = arith.constant 4 : index
    %c0_31 = arith.constant 0 : index
    %c0_32 = arith.constant 0 : index
    %52 = vector.load %arg1[%c4, %c0_31, %c0_32] : memref<5x128x128xbf16, #tpu.memory_space<vmem>>, vector<1x128x128xbf16>
    %53 = vector.shape_cast %52 : vector<1x128x128xbf16> to vector<128x128xbf16>
    %cst_33 = arith.constant dense<0.000000e+00> : vector<8x128xf32>
    %54 = tpu.matmul %51, %53, %cst_33 {dimension_numbers = #tpu.dot_dimension_numbers<[1], [0], [0], [1], [0, 0, 1, 1], [], []>} : vector<8x128xbf16>, vector<128x128xbf16>, vector<8x128xf32> -> vector<8x128xf32>
    %c4_34 = arith.constant 4 : index
    %c0_35 = arith.constant 0 : index
    %c0_36 = arith.constant 0 : index
    %55 = vector.load %arg2[%c4_34, %c0_35, %c0_36] : memref<5x1x128xf32, #tpu.memory_space<vmem>>, vector<1x1x128xf32>
    %56 = vector.shape_cast %55 : vector<1x1x128xf32> to vector<1x128xf32>
    %57 = vector.broadcast %56 : vector<1x128xf32> to vector<8x128xf32>
    %58 = arith.addf %54, %57 : vector<8x128xf32>
    %cst_37 = arith.constant 2.000000e-01 : f32
    %59 = vector.broadcast %cst_37 : f32 to vector<8x128xf32>
    %60 = arith.mulf %59, %58 : vector<8x128xf32>
    %61 = arith.maximumf %58, %60 : vector<8x128xf32>
    %62 = vector.shape_cast %61 : vector<8x128xf32> to vector<8x1x128xf32>
    %63 = vector.shape_cast %62 : vector<8x1x128xf32> to vector<8x1x128xf32>
    %64 = vector.broadcast %63 : vector<8x1x128xf32> to vector<8x8x128xf32>
    %c0_38 = arith.constant 0 : index
    %c0_39 = arith.constant 0 : index
    %c0_40 = arith.constant 0 : index
    %65 = vector.load %arg3[%c0_38, %c0_39, %c0_40] : memref<8x8x128xf32, #tpu.memory_space<vmem>>, vector<8x8x128xf32>
    tpu.vector_store %arg3[%c0_38, %c0_39, %c0_40], %64 {strides = array<i32>} : memref<8x8x128xf32, #tpu.memory_space<vmem>>, vector<8x8x128xf32>,
    return
  }
}

</mosaic_0001>

<llo_original>
// kernel: tpu_custom_call.1
$region0: #{tpu_custom_call.1}
  #allocation0 [shape = 'u32[]', space=smem, size = 0x4, offset = 0x4, fixed_abs, tag = 'smem constant byte address 0x4 - core index']
  #allocation1 [shape = 'u32[72,128]{1,0:T(1,128)}', space=vmem, size = 0x9000, scoped, tag = 'internal scratch']
  %s0 = inlined_call_operand.hbm [shape: f32[8,32], index: 0, kind: input, shape index: {}]
  %s1 = inlined_call_operand.hbm [shape: bf16[5,128,128], index: 1, kind: input, shape index: {}]
  %s2 = inlined_call_operand.hbm [shape: f32[5,1,128], index: 2, kind: input, shape index: {}]
  %s3 = inlined_call_operand.hbm [shape: f32[8,8,128], index: 3, kind: output, shape index: {}]
  %s4 = sld [smem:[#allocation0]]
  $region34: #{tpu_custom_call.1} parent=0
    _
  %s6 = ssub.s32 1, %s4
  %s7 = scalar_select 0, %s6, %s4
  $region1: #{tpu_custom_call.1} parent=0
    #allocation2 [shape = 'u8[4096]{0}', space=vmem, size = 0x1000, scoped, tag = 'input window, operand 0, single buffered']
    #allocation3 [shape = 's32[1]{0}', space=sflag, size = 0x4, scoped, tag = 'scoped memory for tpu_custom_call.1']
    #allocation4 [shape = 's32[1]{0}', space=sflag, size = 0x4, scoped, tag = 'scoped memory for tpu_custom_call.1']
    #allocation5 [shape = 'u8[163840]{0}', space=vmem, size = 0x28000, scoped, tag = 'input window, operand 1, single buffered']
    #allocation6 [shape = 's32[1]{0}', space=sflag, size = 0x4, scoped, tag = 'scoped memory for tpu_custom_call.1']
    #allocation7 [shape = 'u8[2560]{0}', space=vmem, size = 0xc00, scoped, tag = 'input window, operand 2, single buffered']
    #allocation8 [shape = 'u8[32768]{0}', space=vmem, size = 0x8000, scoped, tag = 'output window, operand 0, single buffered']
    %8 = vsyncpa [#allocation3], 0
    %9 = vsyncpa [#allocation6], 0
    %10 = vsyncpa [#allocation4], 0
    // Predicated region
    $region2: #{tpu_custom_call.1} parent=1 // pred_check
      _
    $region3: #{tpu_custom_call.1} parent=1 // pred_check_branch
      %12 = sbr.rel (0) target = $region5
    $region4: #{tpu_custom_call.1} parent=1 // pred_region
      %14 = vsyncadd [#allocation3], 0
      %s16 = sshll.u32 %s0, 4
      %s17 = int_to_ptr.hbm [resolvable:$true] %s16
      %s18 = sshll.u32 [#allocation2], 4
      %s19 = int_to_ptr.vmem [resolvable:$true] %s18
      %21 = dma.hbm_to_vmem [thread:$0]  %s17, 128, %s19, [#allocation3]
    $region5: #{tpu_custom_call.1} parent=1 // pred_fallthru
      _
    // Predicated region
    $region6: #{tpu_custom_call.1} parent=1 // pred_check
      _
    $region7: #{tpu_custom_call.1} parent=1 // pred_check_branch
      %23 = sbr.rel (0) target = $region9
    $region8: #{tpu_custom_call.1} parent=1 // pred_region
      %25 = vsyncadd [#allocation6], 0
      %s26 = sshll.u32 %s1, 4
      %s27 = int_to_ptr.hbm [resolvable:$true] %s26
      %s28 = sshll.u32 [#allocation5], 4
      %s29 = int_to_ptr.vmem [resolvable:$true] %s28
      %34 = dma.hbm_to_vmem [thread:$0]  %s27, 5120, %s29, [#allocation6], 64, 64, 4
    $region9: #{tpu_custom_call.1} parent=1 // pred_fallthru
      _
    // Predicated region
    $region10: #{tpu_custom_call.1} parent=1 // pred_check
      _
    $region11: #{tpu_custom_call.1} parent=1 // pred_check_branch
      %36 = sbr.rel (0) target = $region13
    $region12: #{tpu_custom_call.1} parent=1 // pred_region
      %38 = vsyncadd [#allocation6], 0
      %s39 = sshll.u32 %s2, 4
      %s40 = int_to_ptr.hbm [resolvable:$true] %s39
      %s41 = sshll.u32 [#allocation7], 4
      %s42 = int_to_ptr.vmem [resolvable:$true] %s41
      %47 = dma.hbm_to_vmem [thread:$0]  %s40, 80, %s42, [#allocation6], 16, 16, 1
    $region13: #{tpu_custom_call.1} parent=1 // pred_fallthru
      _
    // Predicated region
    $region14: #{tpu_custom_call.1} parent=1 // pred_check
      _
    $region15: #{tpu_custom_call.1} parent=1 // pred_check_branch
      %49 = sbr.rel (0) target = $region17
    $region16: #{tpu_custom_call.1} parent=1 // pred_region
      %51 = dma.done [#allocation3], 128
    $region17: #{tpu_custom_call.1} parent=1 // pred_fallthru
      _
    // Predicated region
    $region18: #{tpu_custom_call.1} parent=1 // pred_check
      _
    $region19: #{tpu_custom_call.1} parent=1 // pred_check_branch
      %53 = sbr.rel (0) target = $region21
    $region20: #{tpu_custom_call.1} parent=1 // pred_region
      %55 = dma.done [#allocation6], 5120
    $region21: #{tpu_custom_call.1} parent=1 // pred_fallthru
      _
    // Predicated region
    $region22: #{tpu_custom_call.1} parent=1 // pred_check
      _
    $region23: #{tpu_custom_call.1} parent=1 // pred_check_branch
      %57 = sbr.rel (0) target = $region25
    $region24: #{tpu_custom_call.1} parent=1 // pred_region
      %59 = dma.done [#allocation6], 80
    $region25: #{tpu_custom_call.1} parent=1 // pred_fallthru
      _
    %v61 = vld [vmem:[#allocation2] sm:$0xff]
    %v62 = vpack.c.bf16 %v61, %v61
    %v63 = vld [vmem:[#allocation5] sm:$0xf]
    %v64 = vld [vmem:[#allocation5 + $0x4] sm:$0xf]
    %v65 = vld [vmem:[#allocation5 + $0x8] sm:$0xf]
    %v66 = vld [vmem:[#allocation5 + $0xc] sm:$0xf]
    %v67 = vld [vmem:[#allocation7] sm:$0x1]
    %v69 = vperm.slane %v67, 0
    %v75 = vunpack.c.l.b16 %v63
    %v76 = vunpack.c.l.b16 %v64
    %v77 = vunpack.c.l.b16 %v65
    %v78 = vunpack.c.l.b16 %v66
    %v79 = vpack.c.b16 %v76, %v75
    %v80 = vpack.c.b16 %v78, %v77
    %vm83 = vcmask 261120
    %v85 = vsel %vm83, %v62, 0
    %87 = vmatpush.bf16.msra.mxu0 0
    %88 = vmatpush.bf16.msra.mxu0 0
    %89 = vmatpush.bf16.msra.mxu0 0
    %90 = vmatpush.bf16.msra.mxu0 0
    %91 = vmatpush.bf16.msra.mxu0 0
    %92 = vmatpush.bf16.msra.mxu0 0
    %93 = vmatpush.bf16.msra.mxu0 %v80
    %94 = vmatpush.bf16.msra.mxu0 %v79
    %95 = vmatmul.bf16.gmra.mxu0 %v85
    %v96 = vpop.f32.mrf.mxu0
    %v97 = vadd.f32 %v69, %v96
    %v98 = vpop.f32.mrf.mxu0
    %99 = vdwg.mxu0
    %v100 = vmax.f32 %v97, 0.0
    %v101 = vpack.c.bf16 %v100, %v100
    %s102 = scalar_lea.vmem [#allocation5], 64
    %v103 = vld [vmem:[%s102] sm:$0xf]
    %v104 = vld [vmem:[%s102 + $0x4] sm:$0xf]
    %v105 = vld [vmem:[%s102 + $0x8] sm:$0xf]
    %v106 = vld [vmem:[%s102 + $0xc] sm:$0xf]
    %v107 = vld [vmem:[%s102 + $0x10] sm:$0xf]
    %v108 = vld [vmem:[%s102 + $0x14] sm:$0xf]
    %v109 = vld [vmem:[%s102 + $0x18] sm:$0xf]
    %v110 = vld [vmem:[%s102 + $0x1c] sm:$0xf]
    %v111 = vld [vmem:[%s102 + $0x20] sm:$0xf]
    %v112 = vld [vmem:[%s102 + $0x24] sm:$0xf]
    %v113 = vld [vmem:[%s102 + $0x28] sm:$0xf]
    %v114 = vld [vmem:[%s102 + $0x2c] sm:$0xf]
    %v115 = vld [vmem:[%s102 + $0x30] sm:$0xf]
    %v116 = vld [vmem:[%s102 + $0x34] sm:$0xf]
    %v117 = vld [vmem:[%s102 + $0x38] sm:$0xf]
    %v118 = vld [vmem:[%s102 + $0x3c] sm:$0xf]
    %s119 = scalar_lea.vmem [#allocation7], 1
    %v120 = vld [vmem:[%s119] sm:$0x1]
    %v122 = vperm.slane %v120, 0
    %v140 = vunpack.c.l.b16 %v103
    %v141 = vunpack.c.l.b16 %v104
    %v142 = vunpack.c.l.b16 %v105
    %v143 = vunpack.c.l.b16 %v106
    %v144 = vunpack.c.l.b16 %v107
    %v145 = vunpack.c.l.b16 %v108
    %v146 = vunpack.c.l.b16 %v109
    %v147 = vunpack.c.l.b16 %v110
    %v148 = vunpack.c.l.b16 %v111
    %v149 = vunpack.c.l.b16 %v112
    %v150 = vunpack.c.l.b16 %v113
    %v151 = vunpack.c.l.b16 %v114
    %v152 = vunpack.c.l.b16 %v115
    %v153 = vunpack.c.l.b16 %v116
    %v154 = vunpack.c.l.b16 %v117
    %v155 = vunpack.c.l.b16 %v118
    %v156 = vpack.c.b16 %v141, %v140
    %v157 = vpack.c.b16 %v143, %v142
    %v158 = vpack.c.b16 %v145, %v144
    %v159 = vpack.c.b16 %v147, %v146
    %v160 = vpack.c.b16 %v149, %v148
    %v161 = vpack.c.b16 %v151, %v150
    %v162 = vpack.c.b16 %v153, %v152
    %v163 = vpack.c.b16 %v155, %v154
    %172 = vmatpush.bf16.msra.mxu0 %v163
    %173 = vmatpush.bf16.msra.mxu0 %v162
    %174 = vmatpush.bf16.msra.mxu0 %v161
    %175 = vmatpush.bf16.msra.mxu0 %v160
    %176 = vmatpush.bf16.msra.mxu0 %v159
    %177 = vmatpush.bf16.msra.mxu0 %v158
    %178 = vmatpush.bf16.msra.mxu0 %v157
    %179 = vmatpush.bf16.msra.mxu0 %v156
    %180 = vmatmul.bf16.gmra.mxu0 %v101
    %v181 = vpop.f32.mrf.mxu0
    %v182 = vadd.f32 %v122, %v181
    %v183 = vpop.f32.mrf.mxu0
    %184 = vdwg.mxu0
    %v185 = vmul.f32 %v182, %v182
    %186 = vadd.xlane.f32.xlu0 %v185
    %v187 = vpop.xlane.xlu0 %186
    %v188 = vrcp.pop 128.0
    %v189 = vmul.f32 128.0, %v188
    %v190 = vsub.f32 1.0, %v189
    %v191 = vmul.f32 %v188, %v190
    %v192 = vadd.f32 %v188, %v191
    %vm193 = vweird.f32 %v188
    %v194 = vsel %vm193, %v188, %v192
    %v195 = vmul.f32 %v187, %v194
    %v196 = vadd.f32 %v195, 1e-08
    %v197 = vrsqrt.pop %v196
    %v198 = vmul.f32 %v197, %v196
    %v199 = vmul.f32 %v198, %v197
    %v200 = vmul.f32 0.5, %v199
    %v201 = vsub.f32 1.5, %v200
    %v202 = vmul.f32 %v197, %v201
    %vm203 = vweird.f32 %v196
    %vm204 = vweird.f32 %v197
    %vm205 = vmor %vm203, %vm204
    %v206 = vsel %vm205, %v197, %v202
    %v207 = vmul.f32 %v182, %v206
    %v208 = vpack.c.bf16 %v207, %v207
    %s209 = scalar_lea.vmem [#allocation5], 128
    %v210 = vld [vmem:[%s209] sm:$0xf]
    %v211 = vld [vmem:[%s209 + $0x4] sm:$0xf]
    %v212 = vld [vmem:[%s209 + $0x8] sm:$0xf]
    %v213 = vld [vmem:[%s209 + $0xc] sm:$0xf]
    %v214 = vld [vmem:[%s209 + $0x10] sm:$0xf]
    %v215 = vld [vmem:[%s209 + $0x14] sm:$0xf]
    %v216 = vld [vmem:[%s209 + $0x18] sm:$0xf]
    %v217 = vld [vmem:[%s209 + $0x1c] sm:$0xf]
    %v218 = vld [vmem:[%s209 + $0x20] sm:$0xf]
    %v219 = vld [vmem:[%s209 + $0x24] sm:$0xf]
    %v220 = vld [vmem:[%s209 + $0x28] sm:$0xf]
    %v221 = vld [vmem:[%s209 + $0x2c] sm:$0xf]
    %v222 = vld [vmem:[%s209 + $0x30] sm:$0xf]
    %v223 = vld [vmem:[%s209 + $0x34] sm:$0xf]
    %v224 = vld [vmem:[%s209 + $0x38] sm:$0xf]
    %v225 = vld [vmem:[%s209 + $0x3c] sm:$0xf]
    %s226 = scalar_lea.vmem [#allocation7], 2
    %v227 = vld [vmem:[%s226] sm:$0x1]
    %v229 = vperm.slane %v227, 0
    %v247 = vunpack.c.l.b16 %v210
    %v248 = vunpack.c.l.b16 %v211
    %v249 = vunpack.c.l.b16 %v212
    %v250 = vunpack.c.l.b16 %v213
    %v251 = vunpack.c.l.b16 %v214
    %v252 = vunpack.c.l.b16 %v215
    %v253 = vunpack.c.l.b16 %v216
    %v254 = vunpack.c.l.b16 %v217
    %v255 = vunpack.c.l.b16 %v218
    %v256 = vunpack.c.l.b16 %v219
    %v257 = vunpack.c.l.b16 %v220
    %v258 = vunpack.c.l.b16 %v221
    %v259 = vunpack.c.l.b16 %v222
    %v260 = vunpack.c.l.b16 %v223
    %v261 = vunpack.c.l.b16 %v224
    %v262 = vunpack.c.l.b16 %v225
    %v263 = vpack.c.b16 %v248, %v247
    %v264 = vpack.c.b16 %v250, %v249
    %v265 = vpack.c.b16 %v252, %v251
    %v266 = vpack.c.b16 %v254, %v253
    %v267 = vpack.c.b16 %v256, %v255
    %v268 = vpack.c.b16 %v258, %v257
    %v269 = vpack.c.b16 %v260, %v259
    %v270 = vpack.c.b16 %v262, %v261
    %279 = vmatpush.bf16.msra.mxu0 %v270
    %280 = vmatpush.bf16.msra.mxu0 %v269
    %281 = vmatpush.bf16.msra.mxu0 %v268
    %282 = vmatpush.bf16.msra.mxu0 %v267
    %283 = vmatpush.bf16.msra.mxu0 %v266
    %284 = vmatpush.bf16.msra.mxu0 %v265
    %285 = vmatpush.bf16.msra.mxu0 %v264
    %286 = vmatpush.bf16.msra.mxu0 %v263
    %287 = vmatmul.bf16.gmra.mxu0 %v208
    %v288 = vpop.f32.mrf.mxu0
    %v289 = vadd.f32 %v229, %v288
    %v290 = vpop.f32.mrf.mxu0
    %291 = vdwg.mxu0
    %v292 = vmul.f32 %v289, 0.2
    %v293 = vmax.f32 %v289, %v292
    %v294 = vpack.c.bf16 %v293, %v293
    %s295 = scalar_lea.vmem [#allocation5], 192
    %v296 = vld [vmem:[%s295] sm:$0xf]
    %v297 = vld [vmem:[%s295 + $0x4] sm:$0xf]
    %v298 = vld [vmem:[%s295 + $0x8] sm:$0xf]
    %v299 = vld [vmem:[%s295 + $0xc] sm:$0xf]
    %v300 = vld [vmem:[%s295 + $0x10] sm:$0xf]
    %v301 = vld [vmem:[%s295 + $0x14] sm:$0xf]
    %v302 = vld [vmem:[%s295 + $0x18] sm:$0xf]
    %v303 = vld [vmem:[%s295 + $0x1c] sm:$0xf]
    %v304 = vld [vmem:[%s295 + $0x20] sm:$0xf]
    %v305 = vld [vmem:[%s295 + $0x24] sm:$0xf]
    %v306 = vld [vmem:[%s295 + $0x28] sm:$0xf]
    %v307 = vld [vmem:[%s295 + $0x2c] sm:$0xf]
    %v308 = vld [vmem:[%s295 + $0x30] sm:$0xf]
    %v309 = vld [vmem:[%s295 + $0x34] sm:$0xf]
    %v310 = vld [vmem:[%s295 + $0x38] sm:$0xf]
    %v311 = vld [vmem:[%s295 + $0x3c] sm:$0xf]
    %s312 = scalar_lea.vmem [#allocation7], 3
    %v313 = vld [vmem:[%s312] sm:$0x1]
    %v315 = vperm.slane %v313, 0
    %v333 = vunpack.c.l.b16 %v296
    %v334 = vunpack.c.l.b16 %v297
    %v335 = vunpack.c.l.b16 %v298
    %v336 = vunpack.c.l.b16 %v299
    %v337 = vunpack.c.l.b16 %v300
    %v338 = vunpack.c.l.b16 %v301
    %v339 = vunpack.c.l.b16 %v302
    %v340 = vunpack.c.l.b16 %v303
    %v341 = vunpack.c.l.b16 %v304
    %v342 = vunpack.c.l.b16 %v305
    %v343 = vunpack.c.l.b16 %v306
    %v344 = vunpack.c.l.b16 %v307
    %v345 = vunpack.c.l.b16 %v308
    %v346 = vunpack.c.l.b16 %v309
    %v347 = vunpack.c.l.b16 %v310
    %v348 = vunpack.c.l.b16 %v311
    %v349 = vpack.c.b16 %v334, %v333
    %v350 = vpack.c.b16 %v336, %v335
    %v351 = vpack.c.b16 %v338, %v337
    %v352 = vpack.c.b16 %v340, %v339
    %v353 = vpack.c.b16 %v342, %v341
    %v354 = vpack.c.b16 %v344, %v343
    %v355 = vpack.c.b16 %v346, %v345
    %v356 = vpack.c.b16 %v348, %v347
    %365 = vmatpush.bf16.msra.mxu0 %v356
    %366 = vmatpush.bf16.msra.mxu0 %v355
    %367 = vmatpush.bf16.msra.mxu0 %v354
    %368 = vmatpush.bf16.msra.mxu0 %v353
    %369 = vmatpush.bf16.msra.mxu0 %v352
    %370 = vmatpush.bf16.msra.mxu0 %v351
    %371 = vmatpush.bf16.msra.mxu0 %v350
    %372 = vmatpush.bf16.msra.mxu0 %v349
    %373 = vmatmul.bf16.gmra.mxu0 %v294
    %v374 = vpop.f32.mrf.mxu0
    %v375 = vadd.f32 %v315, %v374
    %v376 = vpop.f32.mrf.mxu0
    %377 = vdwg.mxu0
    %v378 = vmul.f32 %v375, 0.2
    %v379 = vmax.f32 %v375, %v378
    %v380 = vpack.c.bf16 %v379, %v379
    %s381 = scalar_lea.vmem [#allocation5], 256
    %v382 = vld [vmem:[%s381] sm:$0xf]
    %v383 = vld [vmem:[%s381 + $0x4] sm:$0xf]
    %v384 = vld [vmem:[%s381 + $0x8] sm:$0xf]
    %v385 = vld [vmem:[%s381 + $0xc] sm:$0xf]
    %v386 = vld [vmem:[%s381 + $0x10] sm:$0xf]
    %v387 = vld [vmem:[%s381 + $0x14] sm:$0xf]
    %v388 = vld [vmem:[%s381 + $0x18] sm:$0xf]
    %v389 = vld [vmem:[%s381 + $0x1c] sm:$0xf]
    %v390 = vld [vmem:[%s381 + $0x20] sm:$0xf]
    %v391 = vld [vmem:[%s381 + $0x24] sm:$0xf]
    %v392 = vld [vmem:[%s381 + $0x28] sm:$0xf]
    %v393 = vld [vmem:[%s381 + $0x2c] sm:$0xf]
    %v394 = vld [vmem:[%s381 + $0x30] sm:$0xf]
    %v395 = vld [vmem:[%s381 + $0x34] sm:$0xf]
    %v396 = vld [vmem:[%s381 + $0x38] sm:$0xf]
    %v397 = vld [vmem:[%s381 + $0x3c] sm:$0xf]
    %s398 = scalar_lea.vmem [#allocation7], 4
    %v399 = vld [vmem:[%s398] sm:$0x1]
    %v401 = vperm.slane %v399, 0
    %v419 = vunpack.c.l.b16 %v382
    %v420 = vunpack.c.l.b16 %v383
    %v421 = vunpack.c.l.b16 %v384
    %v422 = vunpack.c.l.b16 %v385
    %v423 = vunpack.c.l.b16 %v386
    %v424 = vunpack.c.l.b16 %v387
    %v425 = vunpack.c.l.b16 %v388
    %v426 = vunpack.c.l.b16 %v389
    %v427 = vunpack.c.l.b16 %v390
    %v428 = vunpack.c.l.b16 %v391
    %v429 = vunpack.c.l.b16 %v392
    %v430 = vunpack.c.l.b16 %v393
    %v431 = vunpack.c.l.b16 %v394
    %v432 = vunpack.c.l.b16 %v395
    %v433 = vunpack.c.l.b16 %v396
    %v434 = vunpack.c.l.b16 %v397
    %v435 = vpack.c.b16 %v420, %v419
    %v436 = vpack.c.b16 %v422, %v421
    %v437 = vpack.c.b16 %v424, %v423
    %v438 = vpack.c.b16 %v426, %v425
    %v439 = vpack.c.b16 %v428, %v427
    %v440 = vpack.c.b16 %v430, %v429
    %v441 = vpack.c.b16 %v432, %v431
    %v442 = vpack.c.b16 %v434, %v433
    %451 = vmatpush.bf16.msra.mxu0 %v442
    %452 = vmatpush.bf16.msra.mxu0 %v441
    %453 = vmatpush.bf16.msra.mxu0 %v440
    %454 = vmatpush.bf16.msra.mxu0 %v439
    %455 = vmatpush.bf16.msra.mxu0 %v438
    %456 = vmatpush.bf16.msra.mxu0 %v437
    %457 = vmatpush.bf16.msra.mxu0 %v436
    %458 = vmatpush.bf16.msra.mxu0 %v435
    %459 = vmatmul.bf16.gmra.mxu0 %v380
    %v460 = vpop.f32.mrf.mxu0
    %v461 = vadd.f32 %v401, %v460
    %v462 = vpop.f32.mrf.mxu0
    %463 = vdwg.mxu0
    %v464 = vmul.f32 %v461, 0.2
    %v465 = vmax.f32 %v461, %v464
    %v467 = vrot.slane %v465, 1
    %v468 = vrot.slane %v465, 2
    %v469 = vrot.slane %v465, 3
    %v470 = vrot.slane %v465, 4
    %v471 = vrot.slane %v465, 5
    %v472 = vrot.slane %v465, 6
    %v473 = vrot.slane %v465, 7
    %v474 = vperm.slane %v465, 0
    %v475 = vperm.slane %v467, 0
    %v476 = vperm.slane %v468, 0
    %v477 = vperm.slane %v469, 0
    %v478 = vperm.slane %v470, 0
    %v479 = vperm.slane %v471, 0
    %v480 = vperm.slane %v472, 0
    %v481 = vperm.slane %v473, 0
    %490 = vst [vmem:[#allocation8] sm:$0xff] %v474
    %491 = vst [vmem:[#allocation8 + $0x8] sm:$0xff] %v475
    %492 = vst [vmem:[#allocation8 + $0x10] sm:$0xff] %v476
    %493 = vst [vmem:[#allocation8 + $0x18] sm:$0xff] %v477
    %494 = vst [vmem:[#allocation8 + $0x20] sm:$0xff] %v478
    %495 = vst [vmem:[#allocation8 + $0x28] sm:$0xff] %v479
    %496 = vst [vmem:[#allocation8 + $0x30] sm:$0xff] %v480
    %497 = vst [vmem:[#allocation8 + $0x38] sm:$0xff] %v481
    // Predicated region
    $region26: #{tpu_custom_call.1} parent=1 // pred_check
      _
    $region27: #{tpu_custom_call.1} parent=1 // pred_check_branch
      %499 = sbr.rel (0) target = $region29
    $region28: #{tpu_custom_call.1} parent=1 // pred_region
      %501 = vsyncadd [#allocation4], 0
      %s502 = sshll.u32 [#allocation8], 4
      %s503 = int_to_ptr.vmem [resolvable:$true] %s502
      %s504 = sshll.u32 %s3, 4
      %s505 = int_to_ptr.hbm [resolvable:$true] %s504
      %510 = dma.vmem_to_hbm [thread:$0]  %s503, 1024, %s505, [#allocation4], 128, 128, 8
    $region29: #{tpu_custom_call.1} parent=1 // pred_fallthru
      _
    // Predicated region
    $region30: #{tpu_custom_call.1} parent=1 // pred_check
      _
    $region31: #{tpu_custom_call.1} parent=1 // pred_check_branch
      %512 = sbr.rel (0) target = $region33
    $region32: #{tpu_custom_call.1} parent=1 // pred_region
      %514 = dma.done [#allocation4], 1024
    $region33: #{tpu_custom_call.1} parent=1 // pred_fallthru
      _
    %515 = vsyncpa [#allocation3], 1
    %516 = vsyncpa [#allocation6], 1
    %517 = vsyncpa [#allocation4], 1

</llo_original>
